<compile_context>
chip_gen: v7x
topology: tpu7x:2x2x1
jax: 0.10.0
libtpu: 0.0.40
codegen_flags: <defaults>
</compile_context>

<pallas_src>
import math

import jax
import jax.numpy as jnp
from jax import lax
from jax.experimental import pallas as pl
from jax.experimental.pallas import tpu as pltpu


def _round_up(x, m):
    return ((x + m - 1) // m) * m


def _tile_and_pad(dim, target, align):
    """Pick a tile (multiple of `align`, <= target) and the padded dim size."""
    tile = min(target, _round_up(dim, align))
    return tile, _round_up(dim, tile)


def _pad2d(x, rows, cols):
    r, c = x.shape
    if r == rows and c == cols:
        return x
    return jnp.pad(x, ((0, rows - r), (0, cols - c)))


# ----------------------------------------------------------------------------
# Kernel 1: tiled linear projection with fused L2 row-normalization.
#   out[i, :] = (x @ w)[i, :] / ||(x @ w)[i, :]||_2
# grid = (M/tm, K/tk); the feature dim N stays resident so the epilogue sees
# the full row.  bf16 MXU operands, f32 accumulator scratch.
# ----------------------------------------------------------------------------
def _linear_l2norm_kernel(x_ref, w_ref, o_ref, acc_ref):
    k = pl.program_id(1)

    @pl.when(k == 0)
    def _():
        acc_ref[...] = jnp.zeros_like(acc_ref)

    acc_ref[...] += jnp.dot(x_ref[...], w_ref[...],
                            preferred_element_type=jnp.float32)

    @pl.when(k == pl.num_programs(1) - 1)
    def _():
        acc = acc_ref[...]
        sumsq = jnp.sum(acc * acc, axis=-1, keepdims=True)
        # rsqrt (EUP slot) instead of sqrt + divide; tiny floor keeps padded
        # all-zero rows NaN-free without perturbing real feature rows.
        inv = lax.rsqrt(jnp.maximum(sumsq, 1e-30))
        o_ref[...] = acc * inv


def linear_l2norm(x, w, *, tm_target=256, tk_target=512):
    """x: (M, K), w: (K, N) -> row-L2-normalized (Mp, Np) f32 (zero-padded).

    Caller slices back to (M, N); padded rows come out as exact zeros.
    """
    M, K = x.shape
    K2, N = w.shape
    assert K == K2

    tm, Mp = _tile_and_pad(M, tm_target, 8)
    tk, Kp = _tile_and_pad(K, tk_target, 128)
    Np = _round_up(N, 128)  # feature dim resident, lane-dense output

    xp = _pad2d(x.astype(jnp.bfloat16), Mp, Kp)
    wp = _pad2d(w.astype(jnp.bfloat16), Kp, Np)

    return pl.pallas_call(
        _linear_l2norm_kernel,
        out_shape=jax.ShapeDtypeStruct((Mp, Np), jnp.float32),
        grid_spec=pltpu.PrefetchScalarGridSpec(
            num_scalar_prefetch=0,
            grid=(Mp // tm, Kp // tk),
            in_specs=[
                pl.BlockSpec((tm, tk), lambda i, k: (i, k)),
                pl.BlockSpec((tk, Np), lambda i, k: (k, 0)),
            ],
            out_specs=pl.BlockSpec((tm, Np), lambda i, k: (i, 0)),
            scratch_shapes=[pltpu.VMEM((tm, Np), jnp.float32)],
        ),
        compiler_params=pltpu.CompilerParams(
            dimension_semantics=("parallel", "arbitrary"),
            vmem_limit_bytes=48 * 1024 * 1024,
        ),
    )(xp, wp)


# ----------------------------------------------------------------------------
# Kernel 2: scaled cosine-similarity logits on already-normalized features.
#   logits = exp(logit_scale) * img_n @ txt_n.T
# Tiled over (B, num_text); D resident.  trans-B contraction via dot_general
# (no XLU transpose), scale read from SMEM, lane-dense logits tile.
# ----------------------------------------------------------------------------
def _scaled_logits_kernel(scale_ref, imgn_ref, txtn_ref, o_ref):
    logits = lax.dot_general(
        imgn_ref[...].astype(jnp.bfloat16),
        txtn_ref[...].astype(jnp.bfloat16),
        dimension_numbers=(((1,), (1,)), ((), ())),  # contract last dims
        preferred_element_type=jnp.float32,
    )
    o_ref[...] = scale_ref[0] * logits


def scaled_cosine_logits(exp_scale, img_n, txt_n, *, tb_target=256,
                         tbt_target=512):
    """Returns zero-padded (Bp, Btp) f32 logits; caller slices to (B, Bt)."""
    B, D = img_n.shape
    Bt, D2 = txt_n.shape
    assert D == D2

    tb, Bp = _tile_and_pad(B, tb_target, 8)
    tbt, Btp = _tile_and_pad(Bt, tbt_target, 128)  # lane-dense logits tile
    Dp = _round_up(D, 128)

    imgp = _pad2d(img_n, Bp, Dp)
    txtp = _pad2d(txt_n, Btp, Dp)
    scale = jnp.asarray(exp_scale, jnp.float32).reshape(1)

    return pl.pallas_call(
        _scaled_logits_kernel,
        out_shape=jax.ShapeDtypeStruct((Bp, Btp), jnp.float32),
        grid_spec=pltpu.PrefetchScalarGridSpec(
            num_scalar_prefetch=0,
            grid=(Bp // tb, Btp // tbt),
            in_specs=[
                pl.BlockSpec(memory_space=pltpu.MemorySpace.SMEM),  # exp(scale)
                pl.BlockSpec((tb, Dp), lambda i, j: (i, 0)),
                pl.BlockSpec((tbt, Dp), lambda i, j: (j, 0)),
            ],
            out_specs=pl.BlockSpec((tb, tbt), lambda i, j: (i, j)),
        ),
        compiler_params=pltpu.CompilerParams(
            dimension_semantics=("parallel", "parallel"),
            vmem_limit_bytes=48 * 1024 * 1024,
        ),
    )(scale, imgp, txtp)


# ----------------------------------------------------------------------------
# CustomCLIP forward (synthetic encoder heads + fused Pallas kernels)
# ----------------------------------------------------------------------------
def custom_clip_forward(params, image, label):
    B = image.shape[0]
    D = params["w_img"].shape[1]
    Bt = label.shape[0]

    # encode_image (stand-in head): flatten NCHW -> (B, C*H*W), project to the
    # joint embedding dim; L2 norm fused into the matmul epilogue (Pallas).
    # TODO(synk): the full CLIP vision transformer is not re-implemented; this
    # is a linear stand-in with the correct interface shapes.
    img_flat = image.astype(jnp.float32).reshape(B, -1)
    img_n_pad = linear_l2norm(img_flat, params["w_img"])

    # encode_text (stand-in head): gather tokenized prompts for the labels,
    # embed, mean-pool over sequence (plain-JAX glue), project + normalize
    # (Pallas).
    # TODO(synk): in real zero-shot CLIP the per-class text features are fixed
    # and could be precomputed/cached instead of recomputed each forward.
    tok = params["prompts"][label]                    # (Bt, L) int32
    emb = jnp.take(params["embed"], tok, axis=0)      # (Bt, L, E)
    emb_pooled = jnp.mean(emb, axis=1)                # (Bt, E)
    txt_n_pad = linear_l2norm(emb_pooled, params["w_txt"])

    # Scaled cosine-similarity logits; exp() hoisted out of the kernel.
    exp_scale = jnp.exp(params["logit_scale"].astype(jnp.float32))
    logits_pad = scaled_cosine_logits(exp_scale, img_n_pad, txt_n_pad)

    logits = logits_pad[:B, :Bt]
    image_features = img_n_pad[:B, :D]
    text_features = txt_n_pad[:Bt, :D]
    return logits, image_features, text_features


if __name__ == "__main__":
    # Small, deterministic synthetic setup.
    B, C, H, W = 2, 4, 16, 16
    D = 32                 # CLIP joint embedding dim
    NUM_CLASSES = 5        # len(classnames)
    L = 8                  # tokenized prompt length
    VOCAB = 64
    E = 32                 # token embedding dim

    key = jax.random.PRNGKey(0)
    k_img, k_wimg, k_emb, k_wtxt, k_tok = jax.random.split(key, 5)

    image = jax.random.normal(k_img, (B, C, H, W), dtype=jnp.float32)
    label = jnp.array([1, 3], dtype=jnp.int32)

    params = {
        "w_img": jax.random.normal(k_wimg, (C * H * W, D), jnp.float32) * 0.02,
        "embed": jax.random.normal(k_emb, (VOCAB, E), jnp.float32) * 0.02,
        "w_txt": jax.random.normal(k_wtxt, (E, D), jnp.float32) * 0.02,
        "prompts": jax.random.randint(k_tok, (NUM_CLASSES, L), 0, VOCAB,
                                      dtype=jnp.int32),
        # CLIP's init value: ln(1 / 0.07)
        "logit_scale": jnp.float32(math.log(1.0 / 0.07)),
    }

    fwd = jax.jit(custom_clip_forward)
    logits, img_feats, txt_feats = fwd(params, image, label)
    jax.block_until_ready((logits, img_feats, txt_feats))

    assert logits.shape == (B, B)
    assert img_feats.shape == (B, D)
    assert txt_feats.shape == (B, D)

    # Pure-JAX f32 reference; loose tolerance (Pallas path uses bf16 MXU
    # operands with f32 accumulation).
    def ref_forward(params, image, label):
        x = image.astype(jnp.float32).reshape(image.shape[0], -1)
        imgf = x @ params["w_img"]
        tok = params["prompts"][label]
        emb_pooled = jnp.mean(jnp.take(params["embed"], tok, axis=0), axis=1)
        txtf = emb_pooled @ params["w_txt"]
        imgf = imgf / jnp.linalg.norm(imgf, axis=-1, keepdims=True)
        txtf = txtf / jnp.linalg.norm(txtf, axis=-1, keepdims=True)
        lg = jnp.exp(params["logit_scale"]) * imgf @ txtf.T
        return lg, imgf, txtf

    lg_r, if_r, tf_r = ref_forward(params, image, label)
    assert jnp.allclose(img_feats, if_r, rtol=5e-2, atol=2e-2)
    assert jnp.allclose(txt_feats, tf_r, rtol=5e-2, atol=2e-2)
    assert jnp.allclose(logits, lg_r, rtol=5e-2, atol=3e-1)

    print("KERNEL_OK")
</pallas_src>

<mosaic_0001>
module attributes {stable_mosaic.version = 11 : i64} {
  func.func @_linear_l2norm_kernel(%arg0: i32, %arg1: i32, %arg2: memref<8x512xbf16, #tpu.memory_space<vmem>>, %arg3: memref<512x128xbf16, #tpu.memory_space<vmem>>, %arg4: memref<8x128xf32, #tpu.memory_space<vmem>>, %arg5: memref<8x128xf32, #tpu.memory_space<vmem>>) attributes {dimension_semantics = [#tpu.dimension_semantics<parallel>, #tpu.dimension_semantics<arbitrary>], iteration_bounds = array<i64: 1, 2>, scalar_prefetch = 0 : i64, scratch_operands = 1 : i64, tpu.core_type = #tpu.core_type<tc>, window_params = [{transform_indices = @transform_0, window_bounds = array<i64: 8, 512>}, {transform_indices = @transform_1, window_bounds = array<i64: 512, 128>}, {transform_indices = @transform_2, window_bounds = array<i64: 8, 128>}]} {
    %c0_i32 = arith.constant 0 : i32
    %0 = arith.cmpi eq, %arg1, %c0_i32 : i32
    %1 = arith.extui %0 : i1 to i32
    %c0_i32_0 = arith.constant 0 : i32
    %2 = arith.cmpi ne, %1, %c0_i32_0 : i32
    scf.if %2 {
      %cst_9 = arith.constant 0.000000e+00 : f32
      %12 = vector.broadcast %cst_9 : f32 to vector<8x128xf32>
      %c0_10 = arith.constant 0 : index
      %c0_11 = arith.constant 0 : index
      %13 = vector.load %arg5[%c0_10, %c0_11] : memref<8x128xf32, #tpu.memory_space<vmem>>, vector<8x128xf32>
      tpu.vector_store %arg5[%c0_10, %c0_11], %12 {strides = array<i32>} : memref<8x128xf32, #tpu.memory_space<vmem>>, vector<8x128xf32>,
    } else {
    }
    %c0 = arith.constant 0 : index
    %c0_1 = arith.constant 0 : index
    %3 = vector.load %arg5[%c0, %c0_1] : memref<8x128xf32, #tpu.memory_space<vmem>>, vector<8x128xf32>
    %c0_2 = arith.constant 0 : index
    %c0_3 = arith.constant 0 : index
    %4 = vector.load %arg2[%c0_2, %c0_3] : memref<8x512xbf16, #tpu.memory_space<vmem>>, vector<8x512xbf16>
    %c0_4 = arith.constant 0 : index
    %c0_5 = arith.constant 0 : index
    %5 = vector.load %arg3[%c0_4, %c0_5] : memref<512x128xbf16, #tpu.memory_space<vmem>>, vector<512x128xbf16>
    %cst = arith.constant dense<0.000000e+00> : vector<8x128xf32>
    %6 = tpu.matmul %4, %5, %cst {dimension_numbers = #tpu.dot_dimension_numbers<[1], [0], [0], [1], [0, 0, 1, 1], [], []>} : vector<8x512xbf16>, vector<512x128xbf16>, vector<8x128xf32> -> vector<8x128xf32>
    %7 = arith.addf %3, %6 : vector<8x128xf32>
    %c0_6 = arith.constant 0 : index
    %c0_7 = arith.constant 0 : index
    %8 = vector.load %arg5[%c0_6, %c0_7] : memref<8x128xf32, #tpu.memory_space<vmem>>, vector<8x128xf32>
    tpu.vector_store %arg5[%c0_6, %c0_7], %7 {strides = array<i32>} : memref<8x128xf32, #tpu.memory_space<vmem>>, vector<8x128xf32>,
    %c1_i32 = arith.constant 1 : i32
    %9 = arith.cmpi eq, %arg1, %c1_i32 : i32
    %10 = arith.extui %9 : i1 to i32
    %c0_i32_8 = arith.constant 0 : i32
    %11 = arith.cmpi ne, %10, %c0_i32_8 : i32
    scf.if %11 {
      %c0_9 = arith.constant 0 : index
      %c0_10 = arith.constant 0 : index
      %12 = vector.load %arg5[%c0_9, %c0_10] : memref<8x128xf32, #tpu.memory_space<vmem>>, vector<8x128xf32>
      %13 = arith.mulf %12, %12 : vector<8x128xf32>
      %cst_11 = arith.constant dense<0.000000e+00> : vector<8xf32>
      %14 = vector.multi_reduction <add>, %13, %cst_11 [1] : vector<8x128xf32> to vector<8xf32>
      %15 = vector.shape_cast %14 : vector<8xf32> to vector<8x1xf32>
      %cst_12 = arith.constant 1.000000e-30 : f32
      %16 = vector.broadcast %cst_12 : f32 to vector<8x1xf32>
      %17 = arith.maximumf %15, %16 : vector<8x1xf32>
      %18 = math.rsqrt %17 : vector<8x1xf32>
      %19 = vector.broadcast %18 : vector<8x1xf32> to vector<8x128xf32>
      %20 = arith.mulf %12, %19 : vector<8x128xf32>
      %c0_13 = arith.constant 0 : index
      %c0_14 = arith.constant 0 : index
      %21 = vector.load %arg4[%c0_13, %c0_14] : memref<8x128xf32, #tpu.memory_space<vmem>>, vector<8x128xf32>
      tpu.vector_store %arg4[%c0_13, %c0_14], %20 {strides = array<i32>} : memref<8x128xf32, #tpu.memory_space<vmem>>, vector<8x128xf32>,
    } else {
    }
    return
  }
  func.func @transform_0(%arg0: i32, %arg1: i32) -> (i32, i32) {
    %c0_i32 = arith.constant 0 : i32
    return %arg0, %arg1 : i32, i32
  }
  func.func @transform_1(%arg0: i32, %arg1: i32) -> (i32, i32) {
    %c0_i32 = arith.constant 0 : i32
    %c0_i32_0 = arith.constant 0 : i32
    return %arg1, %c0_i32 : i32, i32
  }
  func.func @transform_2(%arg0: i32, %arg1: i32) -> (i32, i32) {
    %c0_i32 = arith.constant 0 : i32
    %c0_i32_0 = arith.constant 0 : i32
    return %arg0, %c0_i32 : i32, i32
  }
}

module attributes {stable_mosaic.version = 11 : i64} {
  func.func @_scaled_logits_kernel(%arg0: i32, %arg1: i32, %arg2: memref<1xf32, #tpu.memory_space<smem>>, %arg3: memref<8x128xf32, #tpu.memory_space<vmem>>, %arg4: memref<128x128xf32, #tpu.memory_space<vmem>>, %arg5: memref<8x128xf32, #tpu.memory_space<vmem>>) attributes {dimension_semantics = [#tpu.dimension_semantics<parallel>, #tpu.dimension_semantics<parallel>], iteration_bounds = array<i64: 1, 1>, scalar_prefetch = 0 : i64, scratch_operands = 0 : i64, tpu.core_type = #tpu.core_type<tc>, window_params = [{transform_indices = @transform_0, window_bounds = array<i64: 1>}, {transform_indices = @transform_1, window_bounds = array<i64: 8, 128>}, {transform_indices = @transform_2, window_bounds = array<i64: 128, 128>}, {transform_indices = @transform_3, window_bounds = array<i64: 8, 128>}]} {
    %c0 = arith.constant 0 : index
    %c0_0 = arith.constant 0 : index
    %0 = vector.load %arg3[%c0, %c0_0] : memref<8x128xf32, #tpu.memory_space<vmem>>, vector<8x128xf32>
    %1 = arith.truncf %0 : vector<8x128xf32> to vector<8x128xbf16>
    %c0_1 = arith.constant 0 : index
    %c0_2 = arith.constant 0 : index
    %2 = vector.load %arg4[%c0_1, %c0_2] : memref<128x128xf32, #tpu.memory_space<vmem>>, vector<128x128xf32>
    %3 = arith.truncf %2 : vector<128x128xf32> to vector<128x128xbf16>
    %cst = arith.constant dense<0.000000e+00> : vector<8x128xf32>
    %4 = tpu.matmul %1, %3, %cst {dimension_numbers = #tpu.dot_dimension_numbers<[1], [1], [0], [0], [0, 0, 1, 0], [], []>} : vector<8x128xbf16>, vector<128x128xbf16>, vector<8x128xf32> -> vector<8x128xf32>
    %c0_3 = arith.constant 0 : index
    %5 = memref.load %arg2[%c0_3] : memref<1xf32, #tpu.memory_space<smem>>
    %6 = vector.broadcast %5 : f32 to vector<8x128xf32>
    %7 = arith.mulf %6, %4 : vector<8x128xf32>
    %c0_4 = arith.constant 0 : index
    %c0_5 = arith.constant 0 : index
    %8 = vector.load %arg5[%c0_4, %c0_5] : memref<8x128xf32, #tpu.memory_space<vmem>>, vector<8x128xf32>
    tpu.vector_store %arg5[%c0_4, %c0_5], %7 {strides = array<i32>} : memref<8x128xf32, #tpu.memory_space<vmem>>, vector<8x128xf32>,
    return
  }
  func.func @transform_0(%arg0: i32, %arg1: i32) -> i32 {
    %c0_i32 = arith.constant 0 : i32
    %c0_i32_0 = arith.constant 0 : i32
    return %c0_i32 : i32
  }
  func.func @transform_1(%arg0: i32, %arg1: i32) -> (i32, i32) {
    %c0_i32 = arith.constant 0 : i32
    %c0_i32_0 = arith.constant 0 : i32
    return %arg0, %c0_i32 : i32, i32
  }
  func.func @transform_2(%arg0: i32, %arg1: i32) -> (i32, i32) {
    %c0_i32 = arith.constant 0 : i32
    %c0_i32_0 = arith.constant 0 : i32
    return %arg1, %c0_i32 : i32, i32
  }
  func.func @transform_3(%arg0: i32, %arg1: i32) -> (i32, i32) {
    %c0_i32 = arith.constant 0 : i32
    return %arg0, %arg1 : i32, i32
  }
}

module attributes {stable_mosaic.version = 11 : i64} {
  func.func @_linear_l2norm_kernel(%arg0: i32, %arg1: i32, %arg2: memref<8x128xbf16, #tpu.memory_space<vmem>>, %arg3: memref<128x128xbf16, #tpu.memory_space<vmem>>, %arg4: memref<8x128xf32, #tpu.memory_space<vmem>>, %arg5: memref<8x128xf32, #tpu.memory_space<vmem>>) attributes {dimension_semantics = [#tpu.dimension_semantics<parallel>, #tpu.dimension_semantics<arbitrary>], iteration_bounds = array<i64: 1, 1>, scalar_prefetch = 0 : i64, scratch_operands = 1 : i64, tpu.core_type = #tpu.core_type<tc>, window_params = [{transform_indices = @transform_0, window_bounds = array<i64: 8, 128>}, {transform_indices = @transform_1, window_bounds = array<i64: 128, 128>}, {transform_indices = @transform_2, window_bounds = array<i64: 8, 128>}]} {
    %c0_i32 = arith.constant 0 : i32
    %0 = arith.cmpi eq, %arg1, %c0_i32 : i32
    %1 = arith.extui %0 : i1 to i32
    %c0_i32_0 = arith.constant 0 : i32
    %2 = arith.cmpi ne, %1, %c0_i32_0 : i32
    scf.if %2 {
      %cst_10 = arith.constant 0.000000e+00 : f32
      %12 = vector.broadcast %cst_10 : f32 to vector<8x128xf32>
      %c0_11 = arith.constant 0 : index
      %c0_12 = arith.constant 0 : index
      %13 = vector.load %arg5[%c0_11, %c0_12] : memref<8x128xf32, #tpu.memory_space<vmem>>, vector<8x128xf32>
      tpu.vector_store %arg5[%c0_11, %c0_12], %12 {strides = array<i32>} : memref<8x128xf32, #tpu.memory_space<vmem>>, vector<8x128xf32>,
    } else {
    }
    %c0 = arith.constant 0 : index
    %c0_1 = arith.constant 0 : index
    %3 = vector.load %arg5[%c0, %c0_1] : memref<8x128xf32, #tpu.memory_space<vmem>>, vector<8x128xf32>
    %c0_2 = arith.constant 0 : index
    %c0_3 = arith.constant 0 : index
    %4 = vector.load %arg2[%c0_2, %c0_3] : memref<8x128xbf16, #tpu.memory_space<vmem>>, vector<8x128xbf16>
    %c0_4 = arith.constant 0 : index
    %c0_5 = arith.constant 0 : index
    %5 = vector.load %arg3[%c0_4, %c0_5] : memref<128x128xbf16, #tpu.memory_space<vmem>>, vector<128x128xbf16>
    %cst = arith.constant dense<0.000000e+00> : vector<8x128xf32>
    %6 = tpu.matmul %4, %5, %cst {dimension_numbers = #tpu.dot_dimension_numbers<[1], [0], [0], [1], [0, 0, 1, 1], [], []>} : vector<8x128xbf16>, vector<128x128xbf16>, vector<8x128xf32> -> vector<8x128xf32>
    %7 = arith.addf %3, %6 : vector<8x128xf32>
    %c0_6 = arith.constant 0 : index
    %c0_7 = arith.constant 0 : index
    %8 = vector.load %arg5[%c0_6, %c0_7] : memref<8x128xf32, #tpu.memory_space<vmem>>, vector<8x128xf32>
    tpu.vector_store %arg5[%c0_6, %c0_7], %7 {strides = array<i32>} : memref<8x128xf32, #tpu.memory_space<vmem>>, vector<8x128xf32>,
    %c0_i32_8 = arith.constant 0 : i32
    %9 = arith.cmpi eq, %arg1, %c0_i32_8 : i32
    %10 = arith.extui %9 : i1 to i32
    %c0_i32_9 = arith.constant 0 : i32
    %11 = arith.cmpi ne, %10, %c0_i32_9 : i32
    scf.if %11 {
      %c0_10 = arith.constant 0 : index
      %c0_11 = arith.constant 0 : index
      %12 = vector.load %arg5[%c0_10, %c0_11] : memref<8x128xf32, #tpu.memory_space<vmem>>, vector<8x128xf32>
      %13 = arith.mulf %12, %12 : vector<8x128xf32>
      %cst_12 = arith.constant dense<0.000000e+00> : vector<8xf32>
      %14 = vector.multi_reduction <add>, %13, %cst_12 [1] : vector<8x128xf32> to vector<8xf32>
      %15 = vector.shape_cast %14 : vector<8xf32> to vector<8x1xf32>
      %cst_13 = arith.constant 1.000000e-30 : f32
      %16 = vector.broadcast %cst_13 : f32 to vector<8x1xf32>
      %17 = arith.maximumf %15, %16 : vector<8x1xf32>
      %18 = math.rsqrt %17 : vector<8x1xf32>
      %19 = vector.broadcast %18 : vector<8x1xf32> to vector<8x128xf32>
      %20 = arith.mulf %12, %19 : vector<8x128xf32>
      %c0_14 = arith.constant 0 : index
      %c0_15 = arith.constant 0 : index
      %21 = vector.load %arg4[%c0_14, %c0_15] : memref<8x128xf32, #tpu.memory_space<vmem>>, vector<8x128xf32>
      tpu.vector_store %arg4[%c0_14, %c0_15], %20 {strides = array<i32>} : memref<8x128xf32, #tpu.memory_space<vmem>>, vector<8x128xf32>,
    } else {
    }
    return
  }
  func.func @transform_0(%arg0: i32, %arg1: i32) -> (i32, i32) {
    %c0_i32 = arith.constant 0 : i32
    return %arg0, %arg1 : i32, i32
  }
  func.func @transform_1(%arg0: i32, %arg1: i32) -> (i32, i32) {
    %c0_i32 = arith.constant 0 : i32
    %c0_i32_0 = arith.constant 0 : i32
    return %arg1, %c0_i32 : i32, i32
  }
  func.func @transform_2(%arg0: i32, %arg1: i32) -> (i32, i32) {
    %c0_i32 = arith.constant 0 : i32
    %c0_i32_0 = arith.constant 0 : i32
    return %arg0, %c0_i32 : i32, i32
  }
}

</mosaic_0001>

<llo_original>
// kernel: custom_clip_forward.3
$region0: #{custom_clip_forward.3}
  #allocation0 [shape = 'u32[]', space=smem, size = 0x4, offset = 0x4, fixed_abs, tag = 'smem constant byte address 0x4 - core index']
  #allocation1 [shape = 'u32[144,128]{1,0:T(1,128)}', space=vmem, size = 0x12000, scoped, tag = 'internal scratch']
  #allocation2 [shape = 'f32[8,128]{1,0:T(8,128)}', space=vmem, size = 0x1000, scoped, tag = 'scratch operand']
  %s0 = inlined_call_operand.vmem [shape: bf16[8,1024], index: 0, kind: input, shape index: {}]
  %s1 = inlined_call_operand.vmem [shape: bf16[1024,128], index: 1, kind: input, shape index: {}]
  %s2 = inlined_call_operand.vmem [shape: f32[8,128], index: 2, kind: output, shape index: {}]
  %s3 = sld [smem:[#allocation0]]
  $region49: #{custom_clip_forward.3} parent=0
    _
  %s5 = ssub.s32 1, %s3
  %s6 = scalar_select 0, %s5, %s3
  loop: start=0, step=1, limit=4
  $region2: #{custom_clip_forward.3} parent=0 // loop_pre_header
    _
  $region3: #{custom_clip_forward.3} parent=0 // loop_header
    %s8 = sphi 0, %s12
    %p9 = scmp.ge.s32.totalorder %s8, 4
    %s15 = sphi 0, %s27
    %s16 = sphi 0, %s23
    %s17 = sphi 0, %s15
    %s18 = sphi 0, %s16
    %s19 = sphi 0, %s17
    %s20 = sphi 0, %s18
    %s32 = sphi 0, %s34
    %s35 = sphi 0, %s32
    %s36 = sphi 0, %s35
    %s52 = sphi 0, %s36
    %s58 = sphi 0, %s60
    %s61 = sphi 0, %s58
    %s62 = sphi 0, %s61
    %s78 = sphi 0, %s62
    %s84 = sphi 0, %s86
    %s87 = sphi 0, %s84
    %s88 = sphi 0, %s87
    %s104 = sphi 0, %s88
  $region4: #{custom_clip_forward.3} parent=0 // loop_header_branch
    %11 = sbr.rel (%p9) target = $region8
  $region5: #{custom_clip_forward.3} parent=0 // loop_body
    %s13 = ssub.s32 %s8, 1
    %s14 = ssub.s32 %s8, 2
    %s21 = sadd.s32 1, %s16
    %p22 = scmp.ge.s32.totalorder %s21, 2
    %s23 = scalar_select %p22, 0, %s21
    %s24 = sadd.s32 1, %s15
    %s25 = scalar_select %p22, %s24, %s15
    %p26 = scmp.ge.s32.totalorder %s25, 1
    %s27 = scalar_select %p26, 0, %s25
    %s28 = ssub.s32 %s15, %s27
    %s29 = ssub.s32 %s16, %s23
    %s30 = sor.u32 %s28, %s29
    %p31 = scmp.eq.s32.totalorder %s30, 0
    %s33 = sadd.s32 %s32, 1
    %s34 = scalar_select %p31, %s32, %s33
    %p37 = pneg %p31
    %p38 = scmp.eq.s32.totalorder %s8, 1
    %p39 = por %p37, %p38
    %p40 = scmp.ne.s32.totalorder %s32, %s35
    %p41 = scmp.eq.s32.totalorder %s8, 0
    %p42 = por %p40, %p41
    %p43 = scmp.ne.s32.totalorder %s32, %s35
    %p44 = scmp.eq.s32.totalorder %s13, 1
    %p45 = por %p43, %p44
    %p46 = scmp.ne.s32.totalorder %s35, %s36
    %p47 = scmp.eq.s32.totalorder %s13, 0
    %p48 = por %p46, %p47
    %p49 = scmp.ne.s32.totalorder %s35, %s36
    %p50 = scmp.eq.s32.totalorder %s14, 1
    %p51 = por %p49, %p50
    %p53 = scmp.ne.s32.totalorder %s36, %s52
    %p54 = scmp.eq.s32.totalorder %s14, 0
    %p55 = por %p53, %p54
    %s56 = ssub.s32 %s16, %s23
    %p57 = scmp.eq.s32.totalorder %s56, 0
    %s59 = sadd.s32 %s58, 1
    %s60 = scalar_select %p57, %s58, %s59
    %p63 = pneg %p57
    %p64 = scmp.eq.s32.totalorder %s8, 1
    %p65 = por %p63, %p64
    %p66 = scmp.ne.s32.totalorder %s58, %s61
    %p67 = scmp.eq.s32.totalorder %s8, 0
    %p68 = por %p66, %p67
    %p69 = scmp.ne.s32.totalorder %s58, %s61
    %p70 = scmp.eq.s32.totalorder %s13, 1
    %p71 = por %p69, %p70
    %p72 = scmp.ne.s32.totalorder %s61, %s62
    %p73 = scmp.eq.s32.totalorder %s13, 0
    %p74 = por %p72, %p73
    %p75 = scmp.ne.s32.totalorder %s61, %s62
    %p76 = scmp.eq.s32.totalorder %s14, 1
    %p77 = por %p75, %p76
    %p79 = scmp.ne.s32.totalorder %s62, %s78
    %p80 = scmp.eq.s32.totalorder %s14, 0
    %p81 = por %p79, %p80
    %s82 = ssub.s32 %s15, %s27
    %p83 = scmp.eq.s32.totalorder %s82, 0
    %s85 = sadd.s32 %s84, 1
    %s86 = scalar_select %p83, %s84, %s85
    %p89 = pneg %p83
    %p90 = scmp.eq.s32.totalorder %s8, 1
    %p91 = por %p89, %p90
    %p92 = scmp.ne.s32.totalorder %s84, %s87
    %p93 = scmp.eq.s32.totalorder %s8, 0
    %p94 = por %p92, %p93
    %p95 = scmp.ne.s32.totalorder %s84, %s87
    %p96 = scmp.eq.s32.totalorder %s13, 1
    %p97 = por %p95, %p96
    %p98 = scmp.ne.s32.totalorder %s87, %s88
    %p99 = scmp.eq.s32.totalorder %s13, 0
    %p100 = por %p98, %p99
    %p101 = scmp.ne.s32.totalorder %s87, %s88
    %p102 = scmp.eq.s32.totalorder %s14, 1
    %p103 = por %p101, %p102
    %p105 = scmp.ne.s32.totalorder %s88, %s104
    %p106 = scmp.eq.s32.totalorder %s14, 0
    %p107 = por %p105, %p106
    %p108 = scmp.le.s32.totalorder 1, %s8
    %p109 = scmp.lt.s32.totalorder %s8, 3
    %p110 = pnand %p108, %p109
    %p111 = pneg %p110
    // Predicated region
    $region9: #{custom_clip_forward.3} parent=5 // pred_check
      _
    $region10: #{custom_clip_forward.3} parent=5 // pred_check_branch
      %113 = sbr.rel (%p110) target = $region12
    $region11: #{custom_clip_forward.3} parent=5 // pred_region
      %s114 = ssub.s32 %s8, 1
    $region12: #{custom_clip_forward.3} parent=5 // pred_fallthru
      _
    %p115 = scmp.lt.s32.totalorder %s8, 2
    // Predicated region
    $region13: #{custom_clip_forward.3} parent=5 // pred_check
      %p116 = pneg %p115
    $region14: #{custom_clip_forward.3} parent=5 // pred_check_branch
      %118 = sbr.rel (%p116) target = $region16
    $region15: #{custom_clip_forward.3} parent=5 // pred_region
      // Predicated region
      $region17: #{custom_clip_forward.3} parent=15 // pred_check
        %p119 = pneg %p42
      $region18: #{custom_clip_forward.3} parent=15 // pred_check_branch
        %121 = sbr.rel (%p119) target = $region20
      $region19: #{custom_clip_forward.3} parent=15 // pred_region
        %s122 = smul.u32 4, %s16
        %p123 = scmp.lt.s32.totalorder %s15, 0
        %s124 = scalar_select %p123, %s15, 0
        %p125 = scmp.lt.s32.totalorder %s122, 7
        %s126 = scalar_select %p125, %s122, 7
        %s127 = smul.addr %s124, 8
        %s128 = sadd.s32 %s126, %s127
        %s129 = smul.addr %s128, 4
        %s130 = scalar_lea.vmem %s0, %s129
        %s131 = smul.u32 4, %s16
      $region20: #{custom_clip_forward.3} parent=15 // pred_fallthru
        _
      // Predicated region
      $region21: #{custom_clip_forward.3} parent=15 // pred_check
        %p132 = pneg %p68
      $region22: #{custom_clip_forward.3} parent=15 // pred_check_branch
        %134 = sbr.rel (%p132) target = $region24
      $region23: #{custom_clip_forward.3} parent=15 // pred_region
        %s135 = smul.u32 64, %s16
        %p136 = scmp.lt.s32.totalorder %s135, 127
        %s137 = scalar_select %p136, %s135, 127
        %s138 = smul.addr %s137, 4
        %s139 = scalar_lea.vmem %s1, %s138
        %s140 = smul.u32 64, %s16
      $region24: #{custom_clip_forward.3} parent=15 // pred_fallthru
        _
    $region16: #{custom_clip_forward.3} parent=5 // pred_fallthru
      _
    %p141 = scmp.le.s32.totalorder 1, %s8
    %p142 = scmp.lt.s32.totalorder %s8, 3
    %p143 = pnand %p141, %p142
    %p144 = pneg %p143
    // Predicated region
    $region25: #{custom_clip_forward.3} parent=5 // pred_check
      _
    $region26: #{custom_clip_forward.3} parent=5 // pred_check_branch
      %146 = sbr.rel (%p143) target = $region28
    $region27: #{custom_clip_forward.3} parent=5 // pred_region
      %s147 = ssub.s32 %s8, 1
      %s148 = smul.u32 4, %s18
      %p149 = scmp.lt.s32.totalorder %s17, 0
      %s150 = scalar_select %p149, %s17, 0
      %p151 = scmp.lt.s32.totalorder %s148, 7
      %s152 = scalar_select %p151, %s148, 7
      %s153 = smul.addr %s150, 8
      %s154 = sadd.s32 %s152, %s153
      %s155 = smul.addr %s154, 4
      %s156 = scalar_lea.vmem %s0, %s155
      %p157 = pneg %p48
      %p158 = pneg %p45
      %s159 = smul.u32 64, %s18
      %p160 = scmp.lt.s32.totalorder %s159, 127
      %s161 = scalar_select %p160, %s159, 127
      %s162 = smul.addr %s161, 4
      %s163 = scalar_lea.vmem %s1, %s162
      %p164 = pneg %p74
      %p165 = pneg %p71
      %p166 = pneg %p100
      %p167 = pneg %p97
      %p168 = scmp.lt.s32.totalorder %s17, 0
      %s169 = scalar_select %p168, %s17, 0
      %s170 = smul.addr %s169, 8
      %s171 = scalar_lea.vmem %s2, %s170
      %s172 = smul.u32 4, %s18
      %p173 = scmp.lt.s32.totalorder %s17, 0
      %s174 = scalar_select %p173, %s17, 0
      %p175 = scmp.lt.s32.totalorder %s172, 7
      %s176 = scalar_select %p175, %s172, 7
      %s177 = smul.addr %s174, 8
      %s178 = sadd.s32 %s176, %s177
      %s179 = smul.addr %s178, 4
      %s180 = scalar_lea.vmem %s0, %s179
      %s181 = smul.u32 4, %s18
      %s182 = smul.u32 64, %s18
      %p183 = scmp.lt.s32.totalorder %s182, 127
      %s184 = scalar_select %p183, %s182, 127
      %s185 = smul.addr %s184, 4
      %s186 = scalar_lea.vmem %s1, %s185
      %s187 = smul.u32 64, %s18
      %p188 = scmp.lt.s32.totalorder %s17, 0
      %s189 = scalar_select %p188, %s17, 0
      %s190 = smul.addr %s189, 8
      %s191 = scalar_lea.vmem %s2, %s190
      %p193 = scmp.eq.s32.totalorder %s18, 0
      // Predicated region
      $region29: #{custom_clip_forward.3} parent=27 // pred_check
        %p194 = pneg %p193
      $region30: #{custom_clip_forward.3} parent=27 // pred_check_branch
        %196 = sbr.rel (%p194) target = $region32
      $region31: #{custom_clip_forward.3} parent=27 // pred_region
        %197 = vst [vmem:[#allocation2] sm:$0xff] 0.0
      $region32: #{custom_clip_forward.3} parent=27 // pred_fallthru
        _
      %v198 = vld [vmem:[#allocation2] sm:$0xff]
      %v199 = vld [vmem:[%s180] sm:$0xff]
      %v200 = vld [vmem:[%s180 + $0x8] sm:$0xff]
      %v201 = vld [vmem:[%s186] sm:$0xf]
      %v202 = vld [vmem:[%s186 + $0x4] sm:$0xf]
      %v203 = vld [vmem:[%s186 + $0x8] sm:$0xf]
      %v204 = vld [vmem:[%s186 + $0xc] sm:$0xf]
      %v205 = vld [vmem:[%s186 + $0x10] sm:$0xf]
      %v206 = vld [vmem:[%s186 + $0x14] sm:$0xf]
      %v207 = vld [vmem:[%s186 + $0x18] sm:$0xf]
      %v208 = vld [vmem:[%s186 + $0x1c] sm:$0xf]
      %v209 = vld [vmem:[%s186 + $0x20] sm:$0xf]
      %v210 = vld [vmem:[%s186 + $0x24] sm:$0xf]
      %v211 = vld [vmem:[%s186 + $0x28] sm:$0xf]
      %v212 = vld [vmem:[%s186 + $0x2c] sm:$0xf]
      %v213 = vld [vmem:[%s186 + $0x30] sm:$0xf]
      %v214 = vld [vmem:[%s186 + $0x34] sm:$0xf]
      %v215 = vld [vmem:[%s186 + $0x38] sm:$0xf]
      %v216 = vld [vmem:[%s186 + $0x3c] sm:$0xf]
      %v217 = vld [vmem:[%s186 + $0x40] sm:$0xf]
      %v218 = vld [vmem:[%s186 + $0x44] sm:$0xf]
      %v219 = vld [vmem:[%s186 + $0x48] sm:$0xf]
      %v220 = vld [vmem:[%s186 + $0x4c] sm:$0xf]
      %v221 = vld [vmem:[%s186 + $0x50] sm:$0xf]
      %v222 = vld [vmem:[%s186 + $0x54] sm:$0xf]
      %v223 = vld [vmem:[%s186 + $0x58] sm:$0xf]
      %v224 = vld [vmem:[%s186 + $0x5c] sm:$0xf]
      %v225 = vld [vmem:[%s186 + $0x60] sm:$0xf]
      %v226 = vld [vmem:[%s186 + $0x64] sm:$0xf]
      %v227 = vld [vmem:[%s186 + $0x68] sm:$0xf]
      %v228 = vld [vmem:[%s186 + $0x6c] sm:$0xf]
      %v229 = vld [vmem:[%s186 + $0x70] sm:$0xf]
      %v230 = vld [vmem:[%s186 + $0x74] sm:$0xf]
      %v231 = vld [vmem:[%s186 + $0x78] sm:$0xf]
      %v232 = vld [vmem:[%s186 + $0x7c] sm:$0xf]
      %v233 = vld [vmem:[%s186 + $0x80] sm:$0xf]
      %v234 = vld [vmem:[%s186 + $0x84] sm:$0xf]
      %v235 = vld [vmem:[%s186 + $0x88] sm:$0xf]
      %v236 = vld [vmem:[%s186 + $0x8c] sm:$0xf]
      %v237 = vld [vmem:[%s186 + $0x90] sm:$0xf]
      %v238 = vld [vmem:[%s186 + $0x94] sm:$0xf]
      %v239 = vld [vmem:[%s186 + $0x98] sm:$0xf]
      %v240 = vld [vmem:[%s186 + $0x9c] sm:$0xf]
      %v241 = vld [vmem:[%s186 + $0xa0] sm:$0xf]
      %v242 = vld [vmem:[%s186 + $0xa4] sm:$0xf]
      %v243 = vld [vmem:[%s186 + $0xa8] sm:$0xf]
      %v244 = vld [vmem:[%s186 + $0xac] sm:$0xf]
      %v245 = vld [vmem:[%s186 + $0xb0] sm:$0xf]
      %v246 = vld [vmem:[%s186 + $0xb4] sm:$0xf]
      %v247 = vld [vmem:[%s186 + $0xb8] sm:$0xf]
      %v248 = vld [vmem:[%s186 + $0xbc] sm:$0xf]
      %v249 = vld [vmem:[%s186 + $0xc0] sm:$0xf]
      %v250 = vld [vmem:[%s186 + $0xc4] sm:$0xf]
      %v251 = vld [vmem:[%s186 + $0xc8] sm:$0xf]
      %v252 = vld [vmem:[%s186 + $0xcc] sm:$0xf]
      %v253 = vld [vmem:[%s186 + $0xd0] sm:$0xf]
      %v254 = vld [vmem:[%s186 + $0xd4] sm:$0xf]
      %v255 = vld [vmem:[%s186 + $0xd8] sm:$0xf]
      %v256 = vld [vmem:[%s186 + $0xdc] sm:$0xf]
      %v257 = vld [vmem:[%s186 + $0xe0] sm:$0xf]
      %v258 = vld [vmem:[%s186 + $0xe4] sm:$0xf]
      %v259 = vld [vmem:[%s186 + $0xe8] sm:$0xf]
      %v260 = vld [vmem:[%s186 + $0xec] sm:$0xf]
      %v261 = vld [vmem:[%s186 + $0xf0] sm:$0xf]
      %v262 = vld [vmem:[%s186 + $0xf4] sm:$0xf]
      %v263 = vld [vmem:[%s186 + $0xf8] sm:$0xf]
      %v264 = vld [vmem:[%s186 + $0xfc] sm:$0xf]
      %v267 = vunpack.c.l.b16 %v199
      %v268 = vunpack.c.h.b16 %v199
      %v269 = vunpack.c.l.b16 %v200
      %v270 = vunpack.c.h.b16 %v200
      %v271 = vpack.c.b16 %v267, %v267
      %v272 = vpack.c.b16 %v268, %v268
      %v273 = vpack.c.b16 %v269, %v269
      %v274 = vpack.c.b16 %v270, %v270
      %v343 = vunpack.c.l.b16 %v201
      %v344 = vunpack.c.l.b16 %v202
      %v345 = vunpack.c.l.b16 %v203
      %v346 = vunpack.c.l.b16 %v204
      %v347 = vunpack.c.l.b16 %v205
      %v348 = vunpack.c.l.b16 %v206
      %v349 = vunpack.c.l.b16 %v207
      %v350 = vunpack.c.l.b16 %v208
      %v351 = vunpack.c.l.b16 %v209
      %v352 = vunpack.c.l.b16 %v210
      %v353 = vunpack.c.l.b16 %v211
      %v354 = vunpack.c.l.b16 %v212
      %v355 = vunpack.c.l.b16 %v213
      %v356 = vunpack.c.l.b16 %v214
      %v357 = vunpack.c.l.b16 %v215
      %v358 = vunpack.c.l.b16 %v216
      %v359 = vunpack.c.l.b16 %v217
      %v360 = vunpack.c.l.b16 %v218
      %v361 = vunpack.c.l.b16 %v219
      %v362 = vunpack.c.l.b16 %v220
      %v363 = vunpack.c.l.b16 %v221
      %v364 = vunpack.c.l.b16 %v222
      %v365 = vunpack.c.l.b16 %v223
      %v366 = vunpack.c.l.b16 %v224
      %v367 = vunpack.c.l.b16 %v225
      %v368 = vunpack.c.l.b16 %v226
      %v369 = vunpack.c.l.b16 %v227
      %v370 = vunpack.c.l.b16 %v228
      %v371 = vunpack.c.l.b16 %v229
      %v372 = vunpack.c.l.b16 %v230
      %v373 = vunpack.c.l.b16 %v231
      %v374 = vunpack.c.l.b16 %v232
      %v375 = vunpack.c.l.b16 %v233
      %v376 = vunpack.c.l.b16 %v234
      %v377 = vunpack.c.l.b16 %v235
      %v378 = vunpack.c.l.b16 %v236
      %v379 = vunpack.c.l.b16 %v237
      %v380 = vunpack.c.l.b16 %v238
      %v381 = vunpack.c.l.b16 %v239
      %v382 = vunpack.c.l.b16 %v240
      %v383 = vunpack.c.l.b16 %v241
      %v384 = vunpack.c.l.b16 %v242
      %v385 = vunpack.c.l.b16 %v243
      %v386 = vunpack.c.l.b16 %v244
      %v387 = vunpack.c.l.b16 %v245
      %v388 = vunpack.c.l.b16 %v246
      %v389 = vunpack.c.l.b16 %v247
      %v390 = vunpack.c.l.b16 %v248
      %v391 = vunpack.c.l.b16 %v249
      %v392 = vunpack.c.l.b16 %v250
      %v393 = vunpack.c.l.b16 %v251
      %v394 = vunpack.c.l.b16 %v252
      %v395 = vunpack.c.l.b16 %v253
      %v396 = vunpack.c.l.b16 %v254
      %v397 = vunpack.c.l.b16 %v255
      %v398 = vunpack.c.l.b16 %v256
      %v399 = vunpack.c.l.b16 %v257
      %v400 = vunpack.c.l.b16 %v258
      %v401 = vunpack.c.l.b16 %v259
      %v402 = vunpack.c.l.b16 %v260
      %v403 = vunpack.c.l.b16 %v261
      %v404 = vunpack.c.l.b16 %v262
      %v405 = vunpack.c.l.b16 %v263
      %v406 = vunpack.c.l.b16 %v264
      %v407 = vpack.c.b16 %v344, %v343
      %v408 = vpack.c.b16 %v346, %v345
      %v409 = vpack.c.b16 %v348, %v347
      %v410 = vpack.c.b16 %v350, %v349
      %v411 = vpack.c.b16 %v352, %v351
      %v412 = vpack.c.b16 %v354, %v353
      %v413 = vpack.c.b16 %v356, %v355
      %v414 = vpack.c.b16 %v358, %v357
      %v415 = vpack.c.b16 %v360, %v359
      %v416 = vpack.c.b16 %v362, %v361
      %v417 = vpack.c.b16 %v364, %v363
      %v418 = vpack.c.b16 %v366, %v365
      %v419 = vpack.c.b16 %v368, %v367
      %v420 = vpack.c.b16 %v370, %v369
      %v421 = vpack.c.b16 %v372, %v371
      %v422 = vpack.c.b16 %v374, %v373
      %v423 = vpack.c.b16 %v376, %v375
      %v424 = vpack.c.b16 %v378, %v377
      %v425 = vpack.c.b16 %v380, %v379
      %v426 = vpack.c.b16 %v382, %v381
      %v427 = vpack.c.b16 %v384, %v383
      %v428 = vpack.c.b16 %v386, %v385
      %v429 = vpack.c.b16 %v388, %v387
      %v430 = vpack.c.b16 %v390, %v389
      %v431 = vpack.c.b16 %v392, %v391
      %v432 = vpack.c.b16 %v394, %v393
      %v433 = vpack.c.b16 %v396, %v395
      %v434 = vpack.c.b16 %v398, %v397
      %v435 = vpack.c.b16 %v400, %v399
      %v436 = vpack.c.b16 %v402, %v401
      %v437 = vpack.c.b16 %v404, %v403
      %v438 = vpack.c.b16 %v406, %v405
      %471 = vmatprep.subr.bf16.mxu0 0
      %472 = vmatpush1.bf16.msra.mxu0 %v407
      %473 = vmatprep.subr.bf16.mxu0 0
      %474 = vmatpush1.bf16.msra.mxu0 %v408
      %475 = vmatprep.subr.bf16.mxu0 0
      %476 = vmatpush1.bf16.msra.mxu0 %v409
      %477 = vmatprep.subr.bf16.mxu0 0
      %478 = vmatpush1.bf16.msra.mxu0 %v410
      %479 = vmatprep.subr.bf16.mxu0 0
      %480 = vmatpush1.bf16.msra.mxu0 %v411
      %481 = vmatprep.subr.bf16.mxu0 0
      %482 = vmatpush1.bf16.msra.mxu0 %v412
      %483 = vmatprep.subr.bf16.mxu0 0
      %484 = vmatpush1.bf16.msra.mxu0 %v413
      %485 = vmatprep.subr.bf16.mxu0 0
      %486 = vmatpush1.bf16.msra.mxu0 %v414
      %487 = vmatprep.subr.bf16.mxu0 0
      %488 = vmatpush1.bf16.msra.mxu0 %v415
      %489 = vmatprep.subr.bf16.mxu0 0
      %490 = vmatpush1.bf16.msra.mxu0 %v416
      %491 = vmatprep.subr.bf16.mxu0 0
      %492 = vmatpush1.bf16.msra.mxu0 %v417
      %493 = vmatprep.subr.bf16.mxu0 0
      %494 = vmatpush1.bf16.msra.mxu0 %v418
      %495 = vmatprep.subr.bf16.mxu0 0
      %496 = vmatpush1.bf16.msra.mxu0 %v419
      %497 = vmatprep.subr.bf16.mxu0 0
      %498 = vmatpush1.bf16.msra.mxu0 %v420
      %499 = vmatprep.subr.bf16.mxu0 0
      %500 = vmatpush1.bf16.msra.mxu0 %v421
      %501 = vmatprep.subr.bf16.mxu0 0
      %502 = vmatpush1.bf16.msra.mxu0 %v422
      %503 = vmatprep.mubr.bf16.mxu0 %v272
      %504 = vmatmul.mubr.bf16.gmra.mrb[0].mxu0 %v271
      %v505 = vpop.f32.mrb[0].mxu0
      %v506 = vadd.f32 0.0, %v505
      %v507 = vpop.f32.mrb[0].mxu0
      %v508 = vpop.f32.mrb[0].mxu0
      %v509 = vpop.f32.mrb[0].mxu0
      %510 = vdwg.mxu0
      %511 = vmatprep.subr.bf16.mxu0 0
      %512 = vmatpush1.bf16.msra.mxu0 %v423
      %513 = vmatprep.subr.bf16.mxu0 0
      %514 = vmatpush1.bf16.msra.mxu0 %v424
      %515 = vmatprep.subr.bf16.mxu0 0
      %516 = vmatpush1.bf16.msra.mxu0 %v425
      %517 = vmatprep.subr.bf16.mxu0 0
      %518 = vmatpush1.bf16.msra.mxu0 %v426
      %519 = vmatprep.subr.bf16.mxu0 0
      %520 = vmatpush1.bf16.msra.mxu0 %v427
      %521 = vmatprep.subr.bf16.mxu0 0
      %522 = vmatpush1.bf16.msra.mxu0 %v428
      %523 = vmatprep.subr.bf16.mxu0 0
      %524 = vmatpush1.bf16.msra.mxu0 %v429
      %525 = vmatprep.subr.bf16.mxu0 0
      %526 = vmatpush1.bf16.msra.mxu0 %v430
      %527 = vmatprep.subr.bf16.mxu0 0
      %528 = vmatpush1.bf16.msra.mxu0 %v431
      %529 = vmatprep.subr.bf16.mxu0 0
      %530 = vmatpush1.bf16.msra.mxu0 %v432
      %531 = vmatprep.subr.bf16.mxu0 0
      %532 = vmatpush1.bf16.msra.mxu0 %v433
      %533 = vmatprep.subr.bf16.mxu0 0
      %534 = vmatpush1.bf16.msra.mxu0 %v434
      %535 = vmatprep.subr.bf16.mxu0 0
      %536 = vmatpush1.bf16.msra.mxu0 %v435
      %537 = vmatprep.subr.bf16.mxu0 0
      %538 = vmatpush1.bf16.msra.mxu0 %v436
      %539 = vmatprep.subr.bf16.mxu0 0
      %540 = vmatpush1.bf16.msra.mxu0 %v437
      %541 = vmatprep.subr.bf16.mxu0 0
      %542 = vmatpush1.bf16.msra.mxu0 %v438
      %543 = vmatprep.mubr.bf16.mxu0 %v274
      %544 = vmatmul.mubr.bf16.gmra.mrb[0].mxu0 %v273
      %v545 = vpop.f32.mrb[0].mxu0
      %v546 = vadd.f32 %v506, %v545
      %v547 = vpop.f32.mrb[0].mxu0
      %v548 = vpop.f32.mrb[0].mxu0
      %v549 = vpop.f32.mrb[0].mxu0
      %550 = vdwg.mxu0
      %v551 = vadd.f32 %v198, %v546
      %552 = vst [vmem:[#allocation2] sm:$0xff] %v551
      %p553 = scmp.eq.s32.totalorder %s18, 1
      // Predicated region
      $region33: #{custom_clip_forward.3} parent=27 // pred_check
        %p554 = pneg %p553
      $region34: #{custom_clip_forward.3} parent=27 // pred_check_branch
        %556 = sbr.rel (%p554) target = $region36
      $region35: #{custom_clip_forward.3} parent=27 // pred_region
        %v557 = vld [vmem:[#allocation2] sm:$0xff]
        %v558 = vmul.f32 %v557, %v557
        %559 = vadd.xlane.f32.xlu0 %v558
        %v560 = vpop.xlane.xlu0 %559
        %v561 = vmax.f32 %v560, 1e-30
        %v562 = vrsqrt.pop %v561
        %v563 = vmul.f32 %v557, %v562
        %564 = vst [vmem:[%s191] sm:$0xff] %v563
      $region36: #{custom_clip_forward.3} parent=27 // pred_fallthru
        _
      %p565 = scmp.lt.s32.totalorder %s17, 0
      %s566 = scalar_select %p565, %s17, 0
      %s567 = smul.addr %s566, 8
      %s568 = scalar_lea.vmem %s2, %s567
      // Predicated region
      $region37: #{custom_clip_forward.3} parent=27 // pred_check
        %p569 = pneg %p97
      $region38: #{custom_clip_forward.3} parent=27 // pred_check_branch
        %571 = sbr.rel (%p569) target = $region40
      $region39: #{custom_clip_forward.3} parent=27 // pred_region
        _
      $region40: #{custom_clip_forward.3} parent=27 // pred_fallthru
        _
      // Predicated region
      $region41: #{custom_clip_forward.3} parent=27 // pred_check
        %p572 = pneg %p97
      $region42: #{custom_clip_forward.3} parent=27 // pred_check_branch
        %574 = sbr.rel (%p572) target = $region44
      $region43: #{custom_clip_forward.3} parent=27 // pred_region
        %p575 = scmp.lt.s32.totalorder %s17, 0
        %s576 = scalar_select %p575, %s17, 0
        %s577 = smul.addr %s576, 8
        %s578 = scalar_lea.vmem %s2, %s577
      $region44: #{custom_clip_forward.3} parent=27 // pred_fallthru
        _
    $region28: #{custom_clip_forward.3} parent=5 // pred_fallthru
      _
    %p579 = scmp.le.s32.totalorder 2, %s8
    // Predicated region
    $region45: #{custom_clip_forward.3} parent=5 // pred_check
      %p580 = pneg %p579
    $region46: #{custom_clip_forward.3} parent=5 // pred_check_branch
      %582 = sbr.rel (%p580) target = $region48
    $region47: #{custom_clip_forward.3} parent=5 // pred_region
      %s583 = ssub.s32 %s8, 2
    $region48: #{custom_clip_forward.3} parent=5 // pred_fallthru
      _
  $region6: #{custom_clip_forward.3} parent=0 // loop_footer
    %s12 = sadd.s32 1, %s8
  $region7: #{custom_clip_forward.3} parent=0 // loop_footer_branch
    %7 = sbr.rel target = $region3
  $region8: #{custom_clip_forward.3} parent=0 // loop_exit
    _

// kernel: custom_clip_forward.5
$region0: #{custom_clip_forward.5}
  #allocation0 [shape = 'u32[]', space=smem, size = 0x4, offset = 0x4, fixed_abs, tag = 'smem constant byte address 0x4 - core index']
  #allocation1 [shape = 'u32[144,128]{1,0:T(1,128)}', space=vmem, size = 0x12000, scoped, tag = 'internal scratch']
  #allocation2 [shape = 'f32[1]{0:T(128)S(6)}', space=smem, size = 0x200, scoped, tag = 'scoped memory for custom_clip_forward.5']
  %s0 = inlined_call_operand.<no memory space> [shape: f32[1], index: 0, kind: input, shape index: {}]
  %s1 = inlined_call_operand.vmem [shape: f32[8,128], index: 1, kind: input, shape index: {}]
  %s2 = inlined_call_operand.vmem [shape: f32[128,128], index: 2, kind: input, shape index: {}]
  %s3 = inlined_call_operand.vmem [shape: f32[8,128], index: 3, kind: output, shape index: {}]
  %s4 = sld [smem:[#allocation0]]
  $region22: #{custom_clip_forward.5} parent=0
    _
  %s6 = ssub.s32 1, %s4
  %s7 = scalar_select 0, %s6, %s4
  %8 = sst [smem:[#allocation2]] %s0
  // Predicated region
  $region2: #{custom_clip_forward.5} parent=0 // pred_check
    _
  $region3: #{custom_clip_forward.5} parent=0 // pred_check_branch
    %10 = sbr.rel (0) target = $region5
  $region4: #{custom_clip_forward.5} parent=0 // pred_region
    _
  $region5: #{custom_clip_forward.5} parent=0 // pred_fallthru
    _
  // Predicated region
  $region6: #{custom_clip_forward.5} parent=0 // pred_check
    _
  $region7: #{custom_clip_forward.5} parent=0 // pred_check_branch
    %12 = sbr.rel (0) target = $region9
  $region8: #{custom_clip_forward.5} parent=0 // pred_region
    _
  $region9: #{custom_clip_forward.5} parent=0 // pred_fallthru
    _
  // Predicated region
  $region10: #{custom_clip_forward.5} parent=0 // pred_check
    _
  $region11: #{custom_clip_forward.5} parent=0 // pred_check_branch
    %14 = sbr.rel (0) target = $region13
  $region12: #{custom_clip_forward.5} parent=0 // pred_region
    _
  $region13: #{custom_clip_forward.5} parent=0 // pred_fallthru
    _
  %v16 = vld [vmem:[%s1] sm:$0xff]
  %v17 = vpack.c.bf16 %v16, %v16
  %v18 = vld [vmem:[%s2] sm:$0xff]
  %v19 = vld [vmem:[%s2 + $0x8] sm:$0xff]
  %v20 = vld [vmem:[%s2 + $0x10] sm:$0xff]
  %v21 = vld [vmem:[%s2 + $0x18] sm:$0xff]
  %v22 = vld [vmem:[%s2 + $0x20] sm:$0xff]
  %v23 = vld [vmem:[%s2 + $0x28] sm:$0xff]
  %v24 = vld [vmem:[%s2 + $0x30] sm:$0xff]
  %v25 = vld [vmem:[%s2 + $0x38] sm:$0xff]
  %v26 = vld [vmem:[%s2 + $0x40] sm:$0xff]
  %v27 = vld [vmem:[%s2 + $0x48] sm:$0xff]
  %v28 = vld [vmem:[%s2 + $0x50] sm:$0xff]
  %v29 = vld [vmem:[%s2 + $0x58] sm:$0xff]
  %v30 = vld [vmem:[%s2 + $0x60] sm:$0xff]
  %v31 = vld [vmem:[%s2 + $0x68] sm:$0xff]
  %v32 = vld [vmem:[%s2 + $0x70] sm:$0xff]
  %v33 = vld [vmem:[%s2 + $0x78] sm:$0xff]
  %v34 = vpack.c.bf16 %v19, %v18
  %v35 = vpack.c.bf16 %v21, %v20
  %v36 = vpack.c.bf16 %v23, %v22
  %v37 = vpack.c.bf16 %v25, %v24
  %v38 = vpack.c.bf16 %v27, %v26
  %v39 = vpack.c.bf16 %v29, %v28
  %v40 = vpack.c.bf16 %v31, %v30
  %v41 = vpack.c.bf16 %v33, %v32
  %42 = vmatprep.subr.bf16.mxu0 0
  %43 = vmatpush1.bf16.xpose.msra.mxu0 %v34
  %44 = vmatprep.subr.bf16.mxu0 0
  %45 = vmatpush1.bf16.xpose.msra.mxu0 %v35
  %46 = vmatprep.subr.bf16.mxu0 0
  %47 = vmatpush1.bf16.xpose.msra.mxu0 %v36
  %48 = vmatprep.subr.bf16.mxu0 0
  %49 = vmatpush1.bf16.xpose.msra.mxu0 %v37
  %50 = vmatprep.subr.bf16.mxu0 0
  %51 = vmatpush1.bf16.xpose.msra.mxu0 %v38
  %52 = vmatprep.subr.bf16.mxu0 0
  %53 = vmatpush1.bf16.xpose.msra.mxu0 %v39
  %54 = vmatprep.subr.bf16.mxu0 0
  %55 = vmatpush1.bf16.xpose.msra.mxu0 %v40
  %56 = vmatprep.subr.bf16.mxu0 0
  %57 = vmatpush1.bf16.xpose.msra.mxu0 %v41
  %58 = vmatprep.subr.bf16.mxu0 0
  %59 = vmatpush1.bf16.xpose.msra.mxu0 0
  %60 = vmatprep.subr.bf16.mxu0 0
  %61 = vmatpush1.bf16.xpose.msra.mxu0 0
  %62 = vmatprep.subr.bf16.mxu0 0
  %63 = vmatpush1.bf16.xpose.msra.mxu0 0
  %64 = vmatprep.subr.bf16.mxu0 0
  %65 = vmatpush1.bf16.xpose.msra.mxu0 0
  %66 = vmatprep.subr.bf16.mxu0 0
  %67 = vmatpush1.bf16.xpose.msra.mxu0 0
  %68 = vmatprep.subr.bf16.mxu0 0
  %69 = vmatpush1.bf16.xpose.msra.mxu0 0
  %70 = vmatprep.subr.bf16.mxu0 0
  %71 = vmatpush1.bf16.xpose.msra.mxu0 0
  %72 = vmatprep.subr.bf16.mxu0 0
  %73 = vmatpush1.bf16.xpose.msra.mxu0 0
  %74 = vmatprep.mubr.bf16.mxu0 0
  %75 = vmatmul.mubr.bf16.gmra.mrb[0].mxu0 %v17
  %v76 = vpop.f32.mrb[0].mxu0
  %v77 = vadd.f32 0.0, %v76
  %v78 = vpop.f32.mrb[0].mxu0
  %v79 = vpop.f32.mrb[0].mxu0
  %v80 = vpop.f32.mrb[0].mxu0
  %81 = vdwg.mxu0
  %s82 = sld [smem:[#allocation2]]
  %v83 = vstv %s82
  %v84 = vmul.f32 %v83, %v77
  %85 = vst [vmem:[%s3] sm:$0xff] %v84
  // Predicated region
  $region14: #{custom_clip_forward.5} parent=0 // pred_check
    _
  $region15: #{custom_clip_forward.5} parent=0 // pred_check_branch
    %87 = sbr.rel (0) target = $region17
  $region16: #{custom_clip_forward.5} parent=0 // pred_region
    _
  $region17: #{custom_clip_forward.5} parent=0 // pred_fallthru
    _
  // Predicated region
  $region18: #{custom_clip_forward.5} parent=0 // pred_check
    _
  $region19: #{custom_clip_forward.5} parent=0 // pred_check_branch
    %89 = sbr.rel (0) target = $region21
  $region20: #{custom_clip_forward.5} parent=0 // pred_region
    _
  $region21: #{custom_clip_forward.5} parent=0 // pred_fallthru
    _

// kernel: custom_clip_forward.4
$region0: #{custom_clip_forward.4}
  #allocation0 [shape = 'u32[]', space=smem, size = 0x4, offset = 0x4, fixed_abs, tag = 'smem constant byte address 0x4 - core index']
  #allocation1 [shape = 'u32[144,128]{1,0:T(1,128)}', space=vmem, size = 0x12000, scoped, tag = 'internal scratch']
  #allocation2 [shape = 'f32[8,128]{1,0:T(8,128)}', space=vmem, size = 0x1000, scoped, tag = 'scratch operand']
  %s0 = inlined_call_operand.vmem [shape: bf16[8,128], index: 0, kind: input, shape index: {}]
  %s1 = inlined_call_operand.vmem [shape: bf16[128,128], index: 1, kind: input, shape index: {}]
  %s2 = inlined_call_operand.vmem [shape: f32[8,128], index: 2, kind: output, shape index: {}]
  %s3 = sld [smem:[#allocation0]]
  $region26: #{custom_clip_forward.4} parent=0
    _
  %s5 = ssub.s32 1, %s3
  %s6 = scalar_select 0, %s5, %s3
  // Predicated region
  $region2: #{custom_clip_forward.4} parent=0 // pred_check
    _
  $region3: #{custom_clip_forward.4} parent=0 // pred_check_branch
    %8 = sbr.rel (0) target = $region5
  $region4: #{custom_clip_forward.4} parent=0 // pred_region
    _
  $region5: #{custom_clip_forward.4} parent=0 // pred_fallthru
    _
  // Predicated region
  $region6: #{custom_clip_forward.4} parent=0 // pred_check
    _
  $region7: #{custom_clip_forward.4} parent=0 // pred_check_branch
    %10 = sbr.rel (0) target = $region9
  $region8: #{custom_clip_forward.4} parent=0 // pred_region
    _
  $region9: #{custom_clip_forward.4} parent=0 // pred_fallthru
    _
  %p12 = scmp.eq.s32.totalorder 0, 0
  // Predicated region
  $region10: #{custom_clip_forward.4} parent=0 // pred_check
    %p13 = pneg %p12
  $region11: #{custom_clip_forward.4} parent=0 // pred_check_branch
    %15 = sbr.rel (%p13) target = $region13
  $region12: #{custom_clip_forward.4} parent=0 // pred_region
    %16 = vst [vmem:[#allocation2] sm:$0xff] 0.0
  $region13: #{custom_clip_forward.4} parent=0 // pred_fallthru
    _
  %v17 = vld [vmem:[#allocation2] sm:$0xff]
  %v18 = vld [vmem:[%s0] sm:$0xf]
  %v19 = vld [vmem:[%s1] sm:$0xf]
  %v20 = vld [vmem:[%s1 + $0x4] sm:$0xf]
  %v21 = vld [vmem:[%s1 + $0x8] sm:$0xf]
  %v22 = vld [vmem:[%s1 + $0xc] sm:$0xf]
  %v23 = vld [vmem:[%s1 + $0x10] sm:$0xf]
  %v24 = vld [vmem:[%s1 + $0x14] sm:$0xf]
  %v25 = vld [vmem:[%s1 + $0x18] sm:$0xf]
  %v26 = vld [vmem:[%s1 + $0x1c] sm:$0xf]
  %v27 = vld [vmem:[%s1 + $0x20] sm:$0xf]
  %v28 = vld [vmem:[%s1 + $0x24] sm:$0xf]
  %v29 = vld [vmem:[%s1 + $0x28] sm:$0xf]
  %v30 = vld [vmem:[%s1 + $0x2c] sm:$0xf]
  %v31 = vld [vmem:[%s1 + $0x30] sm:$0xf]
  %v32 = vld [vmem:[%s1 + $0x34] sm:$0xf]
  %v33 = vld [vmem:[%s1 + $0x38] sm:$0xf]
  %v34 = vld [vmem:[%s1 + $0x3c] sm:$0xf]
  %v51 = vunpack.c.l.b16 %v19
  %v52 = vunpack.c.l.b16 %v20
  %v53 = vunpack.c.l.b16 %v21
  %v54 = vunpack.c.l.b16 %v22
  %v55 = vunpack.c.l.b16 %v23
  %v56 = vunpack.c.l.b16 %v24
  %v57 = vunpack.c.l.b16 %v25
  %v58 = vunpack.c.l.b16 %v26
  %v59 = vunpack.c.l.b16 %v27
  %v60 = vunpack.c.l.b16 %v28
  %v61 = vunpack.c.l.b16 %v29
  %v62 = vunpack.c.l.b16 %v30
  %v63 = vunpack.c.l.b16 %v31
  %v64 = vunpack.c.l.b16 %v32
  %v65 = vunpack.c.l.b16 %v33
  %v66 = vunpack.c.l.b16 %v34
  %v67 = vpack.c.b16 %v52, %v51
  %v68 = vpack.c.b16 %v54, %v53
  %v69 = vpack.c.b16 %v56, %v55
  %v70 = vpack.c.b16 %v58, %v57
  %v71 = vpack.c.b16 %v60, %v59
  %v72 = vpack.c.b16 %v62, %v61
  %v73 = vpack.c.b16 %v64, %v63
  %v74 = vpack.c.b16 %v66, %v65
  %83 = vmatprep.subr.bf16.mxu0 0
  %84 = vmatpush1.bf16.msra.mxu0 %v67
  %85 = vmatprep.subr.bf16.mxu0 0
  %86 = vmatpush1.bf16.msra.mxu0 %v68
  %87 = vmatprep.subr.bf16.mxu0 0
  %88 = vmatpush1.bf16.msra.mxu0 %v69
  %89 = vmatprep.subr.bf16.mxu0 0
  %90 = vmatpush1.bf16.msra.mxu0 %v70
  %91 = vmatprep.subr.bf16.mxu0 0
  %92 = vmatpush1.bf16.msra.mxu0 %v71
  %93 = vmatprep.subr.bf16.mxu0 0
  %94 = vmatpush1.bf16.msra.mxu0 %v72
  %95 = vmatprep.subr.bf16.mxu0 0
  %96 = vmatpush1.bf16.msra.mxu0 %v73
  %97 = vmatprep.subr.bf16.mxu0 0
  %98 = vmatpush1.bf16.msra.mxu0 %v74
  %99 = vmatprep.subr.bf16.mxu0 0
  %100 = vmatpush1.bf16.msra.mxu0 0
  %101 = vmatprep.subr.bf16.mxu0 0
  %102 = vmatpush1.bf16.msra.mxu0 0
  %103 = vmatprep.subr.bf16.mxu0 0
  %104 = vmatpush1.bf16.msra.mxu0 0
  %105 = vmatprep.subr.bf16.mxu0 0
  %106 = vmatpush1.bf16.msra.mxu0 0
  %107 = vmatprep.subr.bf16.mxu0 0
  %108 = vmatpush1.bf16.msra.mxu0 0
  %109 = vmatprep.subr.bf16.mxu0 0
  %110 = vmatpush1.bf16.msra.mxu0 0
  %111 = vmatprep.subr.bf16.mxu0 0
  %112 = vmatpush1.bf16.msra.mxu0 0
  %113 = vmatprep.subr.bf16.mxu0 0
  %114 = vmatpush1.bf16.msra.mxu0 0
  %115 = vmatprep.mubr.bf16.mxu0 0
  %116 = vmatmul.mubr.bf16.gmra.mrb[0].mxu0 %v18
  %v117 = vpop.f32.mrb[0].mxu0
  %v118 = vadd.f32 0.0, %v117
  %v119 = vpop.f32.mrb[0].mxu0
  %v120 = vpop.f32.mrb[0].mxu0
  %v121 = vpop.f32.mrb[0].mxu0
  %122 = vdwg.mxu0
  %v123 = vadd.f32 %v17, %v118
  %124 = vst [vmem:[#allocation2] sm:$0xff] %v123
  // Predicated region
  $region14: #{custom_clip_forward.4} parent=0 // pred_check
    %p125 = pneg %p12
  $region15: #{custom_clip_forward.4} parent=0 // pred_check_branch
    %127 = sbr.rel (%p125) target = $region17
  $region16: #{custom_clip_forward.4} parent=0 // pred_region
    %v128 = vld [vmem:[#allocation2] sm:$0xff]
    %v129 = vmul.f32 %v128, %v128
    %130 = vadd.xlane.f32.xlu0 %v129
    %v131 = vpop.xlane.xlu0 %130
    %v132 = vmax.f32 %v131, 1e-30
    %v133 = vrsqrt.pop %v132
    %v134 = vmul.f32 %v128, %v133
    %135 = vst [vmem:[%s2] sm:$0xff] %v134
  $region17: #{custom_clip_forward.4} parent=0 // pred_fallthru
    _
  // Predicated region
  $region18: #{custom_clip_forward.4} parent=0 // pred_check
    _
  $region19: #{custom_clip_forward.4} parent=0 // pred_check_branch
    %137 = sbr.rel (0) target = $region21
  $region20: #{custom_clip_forward.4} parent=0 // pred_region
    _
  $region21: #{custom_clip_forward.4} parent=0 // pred_fallthru
    _
  // Predicated region
  $region22: #{custom_clip_forward.4} parent=0 // pred_check
    _
  $region23: #{custom_clip_forward.4} parent=0 // pred_check_branch
    %139 = sbr.rel (0) target = $region25
  $region24: #{custom_clip_forward.4} parent=0 // pred_region
    _
  $region25: #{custom_clip_forward.4} parent=0 // pred_fallthru
    _

</llo_original>
